<compile_context>
chip_gen: v7x
topology: tpu7x:2x2x1
jax: 0.10.0
libtpu: 0.0.40
codegen_flags: <defaults>
</compile_context>

<pallas_src>
import functools

import jax
import jax.numpy as jnp
from jax.experimental import pallas as pl
from jax.experimental.pallas import tpu as pltpu


def _pruner_kernel(x_ref, w_ref, o_ref, *, threshold: float):
    """out = x * (mask(w > thr) * sigmoid_100_86(w) * w); w broadcasts over x."""
    w = w_ref[...].astype(jnp.float32)                 # (TR,1) or (1,TL)
    s = 1.0 / (1.0 + jnp.exp(-100.0 * w + 86.0))       # overflow -> s=0, benign
    m = s * w
    mask = (w > threshold).astype(jnp.float32)
    scale = mask * m                                   # broadcasts over x tile
    xv = x_ref[...].astype(jnp.float32)
    o_ref[...] = (xv * scale).astype(o_ref.dtype)


def pruner_forward(x, pruner_weight, *, threshold: float = 0.75,
                   activated: bool = True):
    """JAX/Pallas equivalent of Pruner.forward for NCHW input `x`.

    pruner_weight: shape (1, C, 1, 1) or (C,), float32.
    """
    if not activated:
        # Forward is the identity when not activated.
        return x

    N, C, H, W = x.shape
    spatial = H * W
    w = pruner_weight.reshape(-1).astype(jnp.float32)          # (C,)

    if spatial >= 128:
        # Layout A: rows = (n, c) pairs, lanes = spatial (lane-dense).
        R, L = N * C, spatial
        x2 = x.reshape(R, L)
        w2 = jnp.broadcast_to(w[None, :], (N, C)).reshape(R, 1)  # (R, 1)
        weight_is_column = True
    else:
        # Layout B: small spatial maps — fold C into lanes so the output stays
        # lane-dense; weight expanded once to a per-(c,h,w) row.
        R, L = N, C * spatial
        x2 = x.reshape(R, L)
        w2 = jnp.repeat(w, spatial)[None, :]                     # (1, L)
        weight_is_column = False

    # ~4 MiB blocks: TL up to 4096 lanes; TR chosen so TR*TL*itemsize <= 4 MiB.
    itemsize = jnp.dtype(x2.dtype).itemsize
    TL = L if L <= 4096 else 4096                       # 4096 % 128 == 0
    max_tr = max(8, ((4 * 1024 * 1024) // (TL * itemsize)) // 8 * 8)
    TR = R if R <= max_tr else max_tr                   # multiple of 8 if tiled
    grid = (pl.cdiv(R, TR), pl.cdiv(L, TL))

    if weight_is_column:
        # j-invariant index_map -> weight block is not re-fetched across lane
        # tiles (keep the lane axis as the trailing grid axis).
        w_spec = pl.BlockSpec((TR, 1), lambda i, j: (i, 0))
    else:
        # i-invariant (only one "row" of weights); re-used across row tiles.
        w_spec = pl.BlockSpec((1, TL), lambda i, j: (0, j))

    out = pl.pallas_call(
        functools.partial(_pruner_kernel, threshold=float(threshold)),
        out_shape=jax.ShapeDtypeStruct((R, L), x.dtype),
        grid=grid,
        in_specs=[
            pl.BlockSpec((TR, TL), lambda i, j: (i, j)),
            w_spec,
        ],
        out_specs=pl.BlockSpec((TR, TL), lambda i, j: (i, j)),
        compiler_params=pltpu.CompilerParams(
            dimension_semantics=("parallel", "parallel"),
            # 4 MiB in + 4 MiB out blocks, double-buffered (~16.25 MiB live):
            # exceeds v5e's 16 MiB default scoped VMEM, stays far under v7x's
            # 64 MiB per-TC physical VMEM.
            vmem_limit_bytes=32 * 1024 * 1024,
        ),
    )(x2, w2)

    return out.reshape(N, C, H, W)


def _pruner_ref(x, pruner_weight, *, threshold: float = 0.75,
                activated: bool = True):
    """Pure-JAX reference of Pruner.forward."""
    if not activated:
        return x
    w = pruner_weight.reshape(1, -1, 1, 1).astype(jnp.float32)
    s = 1.0 / (1.0 + jnp.exp(-100.0 * w + 86.0))
    m = s * w
    mask = (w > threshold).astype(jnp.float32)
    return (x.astype(jnp.float32) * (mask * m)).astype(x.dtype)


if __name__ == "__main__":
    key = jax.random.PRNGKey(0)
    threshold = 0.75

    # Weight values mimicking adjustment_mode() (≈ 1 - U[0, 0.01)) plus one
    # channel below the threshold so the pruning mask is exercised.
    w = jnp.array([0.9995, 0.9923, 0.5000, 0.9961],
                  dtype=jnp.float32).reshape(1, 4, 1, 1)

    test_shapes = [
        (2, 4, 16, 16),   # layout A (H*W = 256 >= 128), single block
        (2, 4, 4, 4),     # layout B (H*W = 16 < 128), lane-dense C*H*W rows
        (2, 4, 80, 64),   # layout A, H*W = 5120 > 4096 -> multi-block lanes
    ]

    for shape in test_shapes:
        k, key = jax.random.split(key)
        x = jax.random.normal(k, shape, dtype=jnp.float32)

        out = pruner_forward(x, w, threshold=threshold, activated=True)
        out = jax.block_until_ready(out)
        ref = _pruner_ref(x, w, threshold=threshold, activated=True)

        assert out.shape == x.shape, (shape, out.shape)
        assert out.dtype == ref.dtype
        err = float(jnp.max(jnp.abs(out - ref)))
        assert jnp.allclose(out, ref, rtol=1e-6, atol=1e-6), (shape, err)

        # Non-activated path: forward is the identity.
        out_id = pruner_forward(x, w, threshold=threshold, activated=False)
        assert jnp.array_equal(out_id, x)

    print("KERNEL_OK")
</pallas_src>

<mosaic_0001>
module attributes {stable_mosaic.version = 11 : i64} {
  func.func @_pruner_kernel(%arg0: i32, %arg1: i32, %arg2: memref<8x256xf32, #tpu.memory_space<vmem>>, %arg3: memref<8x1xf32, #tpu.memory_space<vmem>>, %arg4: memref<8x256xf32, #tpu.memory_space<vmem>>) attributes {dimension_semantics = [#tpu.dimension_semantics<parallel>, #tpu.dimension_semantics<parallel>], iteration_bounds = array<i64: 1, 1>, scalar_prefetch = 0 : i64, scratch_operands = 0 : i64, tpu.core_type = #tpu.core_type<tc>, window_params = [{transform_indices = @transform_0, window_bounds = array<i64: 8, 256>}, {transform_indices = @transform_1, window_bounds = array<i64: 8, 1>}, {transform_indices = @transform_2, window_bounds = array<i64: 8, 256>}]} {
    %c0 = arith.constant 0 : index
    %c0_0 = arith.constant 0 : index
    %0 = vector.load %arg3[%c0, %c0_0] : memref<8x1xf32, #tpu.memory_space<vmem>>, vector<8x1xf32>
    %cst = arith.constant -1.000000e+02 : f32
    %1 = vector.broadcast %cst : f32 to vector<8x1xf32>
    %2 = arith.mulf %1, %0 : vector<8x1xf32>
    %cst_1 = arith.constant 8.600000e+01 : f32
    %3 = vector.broadcast %cst_1 : f32 to vector<8x1xf32>
    %4 = arith.addf %2, %3 : vector<8x1xf32>
    %5 = math.exp %4 : vector<8x1xf32>
    %cst_2 = arith.constant 1.000000e+00 : f32
    %6 = vector.broadcast %cst_2 : f32 to vector<8x1xf32>
    %7 = arith.addf %6, %5 : vector<8x1xf32>
    %cst_3 = arith.constant 1.000000e+00 : f32
    %8 = vector.broadcast %cst_3 : f32 to vector<8x1xf32>
    %9 = arith.divf %8, %7 : vector<8x1xf32>
    %10 = arith.mulf %9, %0 : vector<8x1xf32>
    %cst_4 = arith.constant 7.500000e-01 : f32
    %11 = vector.broadcast %cst_4 : f32 to vector<8x1xf32>
    %12 = arith.cmpf ogt, %0, %11 : vector<8x1xf32>
    %13 = arith.extui %12 : vector<8x1xi1> to vector<8x1xi32>
    %14 = arith.sitofp %13 : vector<8x1xi32> to vector<8x1xf32>
    %15 = arith.mulf %14, %10 : vector<8x1xf32>
    %c0_5 = arith.constant 0 : index
    %c0_6 = arith.constant 0 : index
    %16 = vector.load %arg2[%c0_5, %c0_6] : memref<8x256xf32, #tpu.memory_space<vmem>>, vector<8x256xf32>
    %17 = vector.broadcast %15 : vector<8x1xf32> to vector<8x256xf32>
    %18 = arith.mulf %16, %17 : vector<8x256xf32>
    %c0_7 = arith.constant 0 : index
    %c0_8 = arith.constant 0 : index
    %19 = vector.load %arg4[%c0_7, %c0_8] : memref<8x256xf32, #tpu.memory_space<vmem>>, vector<8x256xf32>
    tpu.vector_store %arg4[%c0_7, %c0_8], %18 {strides = array<i32>} : memref<8x256xf32, #tpu.memory_space<vmem>>, vector<8x256xf32>,
    return
  }
  func.func @transform_0(%arg0: i32, %arg1: i32) -> (i32, i32) {
    %c0_i32 = arith.constant 0 : i32
    return %arg0, %arg1 : i32, i32
  }
  func.func @transform_1(%arg0: i32, %arg1: i32) -> (i32, i32) {
    %c0_i32 = arith.constant 0 : i32
    %c0_i32_0 = arith.constant 0 : i32
    return %arg0, %c0_i32 : i32, i32
  }
  func.func @transform_2(%arg0: i32, %arg1: i32) -> (i32, i32) {
    %c0_i32 = arith.constant 0 : i32
    return %arg0, %arg1 : i32, i32
  }
}

</mosaic_0001>

<llo_original>
// kernel: tpu_custom_call.1
$region0: #{tpu_custom_call.1}
  #allocation0 [shape = 'u32[]', space=smem, size = 0x4, offset = 0x4, fixed_abs, tag = 'smem constant byte address 0x4 - core index']
  #allocation1 [shape = 'u32[144,128]{1,0:T(1,128)}', space=vmem, size = 0x12000, scoped, tag = 'internal scratch']
  %s0 = inlined_call_operand.hbm [shape: f32[8,256], index: 0, kind: input, shape index: {}]
  %s1 = inlined_call_operand.vmem [shape: f32[8,1], index: 1, kind: input, shape index: {}]
  %s2 = inlined_call_operand.hbm [shape: f32[8,256], index: 2, kind: output, shape index: {}]
  %s3 = sld [smem:[#allocation0]]
  $region22: #{tpu_custom_call.1} parent=0
    _
  %s5 = ssub.s32 1, %s3
  %s6 = scalar_select 0, %s5, %s3
  $region1: #{tpu_custom_call.1} parent=0
    #allocation2 [shape = 'u8[8192]{0}', space=vmem, size = 0x2000, scoped, tag = 'input window, operand 0, single buffered']
    #allocation3 [shape = 's32[1]{0}', space=sflag, size = 0x4, scoped, tag = 'scoped memory for tpu_custom_call.1']
    #allocation4 [shape = 's32[1]{0}', space=sflag, size = 0x4, scoped, tag = 'scoped memory for tpu_custom_call.1']
    #allocation5 [shape = 'u8[8192]{0}', space=vmem, size = 0x2000, scoped, tag = 'output window, operand 0, single buffered']
    %7 = vsyncpa [#allocation3], 0
    %8 = vsyncpa [#allocation4], 0
    // Predicated region
    $region2: #{tpu_custom_call.1} parent=1 // pred_check
      _
    $region3: #{tpu_custom_call.1} parent=1 // pred_check_branch
      %10 = sbr.rel (0) target = $region5
    $region4: #{tpu_custom_call.1} parent=1 // pred_region
      %s12 = ssub.s32 256, 256
      %13 = vsyncadd [#allocation3], %s12
      %s15 = sshll.u32 [#allocation2], 4
      %s16 = int_to_ptr.vmem [resolvable:$true] %s15
      %18 = dma.hbm_to_vmem [thread:$0]  %s0, 256, %s16, [#allocation3]
    $region5: #{tpu_custom_call.1} parent=1 // pred_fallthru
      _
    // Predicated region
    $region6: #{tpu_custom_call.1} parent=1 // pred_check
      _
    $region7: #{tpu_custom_call.1} parent=1 // pred_check_branch
      %20 = sbr.rel (0) target = $region9
    $region8: #{tpu_custom_call.1} parent=1 // pred_region
      _
    $region9: #{tpu_custom_call.1} parent=1 // pred_fallthru
      _
    // Predicated region
    $region10: #{tpu_custom_call.1} parent=1 // pred_check
      _
    $region11: #{tpu_custom_call.1} parent=1 // pred_check_branch
      %22 = sbr.rel (0) target = $region13
    $region12: #{tpu_custom_call.1} parent=1 // pred_region
      %23 = dma.done [#allocation3], 256
    $region13: #{tpu_custom_call.1} parent=1 // pred_fallthru
      _
    %v24 = vld [vmem:[%s1] sm:$0xff]
    %v25 = vmul.f32 %v24, -100.0
    %v26 = vadd.f32 %v25, 86.0
    %v27 = vmul.f32 %v26, 1.442695
    %v28 = vpow.pop %v27
    %v29 = vadd.f32 %v28, 1.0
    %v30 = vrcp.pop %v29
    %v31 = vmul.f32 1.0, %v30
    %v32 = vmul.f32 %v31, %v24
    %vm33 = vcmp.gt.f32.partialorder %v24, 0.75
    %v34 = vsel %vm33, 1, 0
    %v35 = vcvt.s32.f32 %v34
    %v36 = vmul.f32 %v35, %v32
    %v37 = vld [vmem:[#allocation2] sm:$0xff]
    %v38 = vld [vmem:[#allocation2 + $0x8] sm:$0xff]
    %40 = vset.pattern.permute.xlu0 0
    %41 = vperm.xlu0 %40, %v36
    %v42 = vpop.permute.xlu0 %41
    %v44 = vmul.f32 %v37, %v42
    %v45 = vmul.f32 %v38, %v42
    %46 = vst [vmem:[#allocation5] sm:$0xff] %v44
    %47 = vst [vmem:[#allocation5 + $0x8] sm:$0xff] %v45
    // Predicated region
    $region14: #{tpu_custom_call.1} parent=1 // pred_check
      _
    $region15: #{tpu_custom_call.1} parent=1 // pred_check_branch
      %49 = sbr.rel (0) target = $region17
    $region16: #{tpu_custom_call.1} parent=1 // pred_region
      %s51 = ssub.s32 256, 256
      %52 = vsyncadd [#allocation4], %s51
      %s54 = sshll.u32 [#allocation5], 4
      %s55 = int_to_ptr.vmem [resolvable:$true] %s54
      %57 = dma.vmem_to_hbm [thread:$0]  %s55, 256, %s2, [#allocation4]
    $region17: #{tpu_custom_call.1} parent=1 // pred_fallthru
      _
    // Predicated region
    $region18: #{tpu_custom_call.1} parent=1 // pred_check
      _
    $region19: #{tpu_custom_call.1} parent=1 // pred_check_branch
      %59 = sbr.rel (0) target = $region21
    $region20: #{tpu_custom_call.1} parent=1 // pred_region
      %60 = dma.done [#allocation4], 256
    $region21: #{tpu_custom_call.1} parent=1 // pred_fallthru
      _
    %61 = vsyncpa [#allocation3], 1
    %62 = vsyncpa [#allocation4], 1

</llo_original>
